<compile_context>
chip_gen: v5e
topology: v5e:2x2
jax: 0.10.0
libtpu: 0.0.40
codegen_flags: <defaults>
</compile_context>

<pallas_src>
import functools
import math

import jax
import jax.numpy as jnp
from jax.experimental import pallas as pl
from jax.experimental.pallas import tpu as pltpu


def _cdiv(a, b):
    return -(-a // b)


def _round_up(a, b):
    return _cdiv(a, b) * b


def _pdl_lane_kernel(data_ref, labels_ref, g_ref, out_ref, *, inv_c):
    """Lane-dense path: groups of C consecutive lanes, L = lcm(C, 128) lanes.

    g_ref: (L, L) block-diagonal ones matrix, resident (constant index_map).
    Writes out_ref (1, 1, L): per-tile lane-wise partials of sum((e - mean)^2).
    """
    e = data_ref[...].astype(jnp.float32) - labels_ref[...].astype(jnp.float32)
    # Group sums on the (otherwise idle) MXU.  bf16 hi/lo split: e_hi passes
    # through the MXU exactly, e_lo is tiny, so the group mean is ~f32 accurate
    # regardless of the hardware matmul pass count -> centered form stays robust.
    e_hi = e.astype(jnp.bfloat16).astype(jnp.float32)
    e_lo = e - e_hi
    g = g_ref[...]
    gsum = (jnp.dot(e_hi, g, preferred_element_type=jnp.float32)
            + jnp.dot(e_lo, g, preferred_element_type=jnp.float32))
    d = e - gsum * inv_c
    # Reduce over the sublane (row) axis only; the tiny lane/tile reduce happens
    # in the wrapper over the (num_tiles, 1, L) partials.
    out_ref[...] = jnp.sum(d * d, axis=0, keepdims=True)[None]


def _pdl_row_kernel(data_ref, labels_ref, mask_ref, out_ref, *, inv_c):
    """Row path (awkward/large C): one original row per slab row, Cp lanes.

    mask_ref: (1, Cp) 0/1 lane-validity mask, resident.  Padded lanes hold
    e == 0 so the row sum needs no mask; the centered value does.
    """
    e = data_ref[...].astype(jnp.float32) - labels_ref[...].astype(jnp.float32)
    mean = jnp.sum(e, axis=1, keepdims=True) * inv_c        # exact f32 XLU reduce
    d = (e - mean) * mask_ref[...]
    out_ref[...] = jnp.sum(d * d, axis=0, keepdims=True)[None]


def pairwise_difference_loss(data, labels, consecutive_size, scale_up=100000,
                             block_bytes=2 * 1024 * 1024):
    """JAX/Pallas equivalent of PairwiseDifferenceLoss.forward."""
    C = int(consecutive_size)
    n = data.size
    if n % C != 0:
        raise ValueError("element count must be divisible by consecutive_size")
    if labels.size != n:
        raise ValueError("data and labels must have the same number of elements")
    num_rows_true = n // C

    # Keep narrow HBM streams narrow (bf16 stays bf16); only non-floats upcast.
    if not jnp.issubdtype(data.dtype, jnp.floating):
        data = data.astype(jnp.float32)
    if not jnp.issubdtype(labels.dtype, jnp.floating):
        labels = labels.astype(jnp.float32)
    d_item = jnp.dtype(data.dtype).itemsize
    l_item = jnp.dtype(labels.dtype).itemsize
    sublane = max(8, 32 // max(1, min(d_item, l_item)))   # 8 f32 / 16 bf16 / 32 i8

    lcm = C * 128 // math.gcd(C, 128)
    lane_dense = lcm <= 1024
    if lane_dense:
        L = lcm
        rows = _cdiv(n, L)
    else:
        # TODO(synk): C with a large odd factor (lcm(C,128) > 1024) uses a padded
        # (rows, round_up(C,128)) layout; lane utilization is C/Cp there.
        L = _round_up(C, 128)
        rows = num_rows_true

    # ~block_bytes per input per block; keep >= 2 grid steps when there is
    # enough work so v7x's two TensorCores both get tiles.
    tb = max(sublane,
             (block_bytes // (L * max(d_item, l_item))) // sublane * sublane)
    if rows > sublane:
        tb = min(tb, _round_up(_cdiv(rows, 2), sublane))
    tb = min(tb, _round_up(rows, sublane))
    num_tiles = _cdiv(rows, tb)
    padded_rows = num_tiles * tb

    if lane_dense:
        # Pad count is a multiple of C (L is), so padded lanes form whole
        # all-zero groups -> mean 0, centered 0, zero contribution.
        pad = padded_rows * L - n
        data2d = jnp.pad(jnp.ravel(data), (0, pad)).reshape(padded_rows, L)
        labels2d = jnp.pad(jnp.ravel(labels), (0, pad)).reshape(padded_rows, L)
        idx = jnp.arange(L, dtype=jnp.int32)
        aux = (idx[:, None] // C == idx[None, :] // C).astype(jnp.float32)   # (L, L)
        aux_spec = pl.BlockSpec((L, L), lambda i: (0, 0))        # resident constant
        kernel = functools.partial(_pdl_lane_kernel, inv_c=1.0 / C)
    else:
        d2 = jnp.ravel(data).reshape(num_rows_true, C)
        l2 = jnp.ravel(labels).reshape(num_rows_true, C)
        data2d = jnp.pad(d2, ((0, padded_rows - num_rows_true), (0, L - C)))
        labels2d = jnp.pad(l2, ((0, padded_rows - num_rows_true), (0, L - C)))
        aux = (jnp.arange(L) < C).astype(jnp.float32)[None, :]               # (1, L)
        aux_spec = pl.BlockSpec((1, L), lambda i: (0, 0))        # resident constant
        kernel = functools.partial(_pdl_row_kernel, inv_c=1.0 / C)

    # VMEM: double-buffered inputs + resident aux + outputs + f32 temporaries.
    vmem_bytes = (2 * tb * L * (d_item + l_item) + 2 * aux.size * 4
                  + 2 * L * 4 + 6 * tb * L * 4 + (2 << 20))
    vmem_bytes = int(min(60 << 20, max(16 << 20, vmem_bytes)))

    partials = pl.pallas_call(
        kernel,
        out_shape=jax.ShapeDtypeStruct((num_tiles, 1, L), jnp.float32),
        grid_spec=pltpu.PrefetchScalarGridSpec(
            num_scalar_prefetch=0,
            grid=(num_tiles,),
            in_specs=[
                pl.BlockSpec((tb, L), lambda i: (i, 0)),
                pl.BlockSpec((tb, L), lambda i: (i, 0)),
                aux_spec,
            ],
            out_specs=pl.BlockSpec((1, 1, L), lambda i: (i, 0, 0)),
        ),
        compiler_params=pltpu.CompilerParams(
            dimension_semantics=("parallel",),   # per-tile partials -> megacore OK
            vmem_limit_bytes=vmem_bytes,
        ),
    )(data2d, labels2d, aux)

    # Two-level f32 reduction (per-tile in kernel, tiny tail here) is plenty of
    # precision because every summand is a small centered square.
    s = jnp.sum(partials)                      # sum over rows of sum_i (e_i - m)^2
    scale_sq = jnp.float32(scale_up) * jnp.float32(scale_up)
    denom = jnp.float32(num_rows_true) * jnp.float32(C) * jnp.float32(C)
    return (2.0 * jnp.float32(C) * s) * scale_sq / denom


def _reference_loss(data, labels, consecutive_size, scale_up=100000):
    d = data.reshape(-1, consecutive_size).astype(jnp.float32)
    l = labels.reshape(-1, consecutive_size).astype(jnp.float32)
    dd = d[:, :, None] - d[:, None, :]
    ld = l[:, :, None] - l[:, None, :]
    return jnp.mean((dd * scale_up - ld * scale_up) ** 2)


if __name__ == "__main__":
    key = jax.random.PRNGKey(0)
    scale_up = 100000

    cases = [
        ((2, 16, 16), 16, jnp.float32),   # main lane-dense path (C | 128)
        ((2, 3, 16), 16, jnp.float32),    # odd row count -> zero-padding path
        ((4, 12), 12, jnp.float32),       # C=12 -> L=lcm(12,128)=384, lane-dense
        ((2, 16, 16), 16, jnp.bfloat16),  # bf16 HBM stream stays bf16
        ((4, 144), 144, jnp.float32),     # lcm(144,128)=1152 -> padded row layout
    ]

    for shape, csz, dtype in cases:
        key, k1, k2 = jax.random.split(key, 3)
        data = jax.random.normal(k1, shape, dtype=jnp.float32).astype(dtype)
        labels = jax.random.normal(k2, shape, dtype=jnp.float32).astype(dtype)

        loss = pairwise_difference_loss(data, labels, csz, scale_up)
        loss = jax.block_until_ready(loss)

        ref = _reference_loss(data, labels, csz, scale_up)
        assert jnp.allclose(loss, ref, rtol=2e-3, atol=1e-2), (shape, dtype, loss, ref)

    print("KERNEL_OK")
</pallas_src>

<mosaic_0001>
module attributes {stable_mosaic.version = 11 : i64} {
  func.func @_pdl_lane_kernel(%arg0: i32, %arg1: memref<8x128xf32, #tpu.memory_space<vmem>>, %arg2: memref<8x128xf32, #tpu.memory_space<vmem>>, %arg3: memref<128x128xf32, #tpu.memory_space<vmem>>, %arg4: memref<1x1x128xf32, #tpu.memory_space<vmem>>) attributes {dimension_semantics = [#tpu.dimension_semantics<parallel>], iteration_bounds = array<i64: 1>, scalar_prefetch = 0 : i64, scratch_operands = 0 : i64, tpu.core_type = #tpu.core_type<tc>, window_params = [{transform_indices = @transform_0, window_bounds = array<i64: 8, 128>}, {transform_indices = @transform_1, window_bounds = array<i64: 8, 128>}, {pipeline_mode = #tpu.pipeline_mode<synchronous>, transform_indices = @transform_2, window_bounds = array<i64: 128, 128>}, {transform_indices = @transform_3, window_bounds = array<i64: 1, 1, 128>}]} {
    %c0 = arith.constant 0 : index
    %c0_0 = arith.constant 0 : index
    %0 = vector.load %arg1[%c0, %c0_0] : memref<8x128xf32, #tpu.memory_space<vmem>>, vector<8x128xf32>
    %c0_1 = arith.constant 0 : index
    %c0_2 = arith.constant 0 : index
    %1 = vector.load %arg2[%c0_1, %c0_2] : memref<8x128xf32, #tpu.memory_space<vmem>>, vector<8x128xf32>
    %2 = arith.subf %0, %1 : vector<8x128xf32>
    %3 = arith.truncf %2 : vector<8x128xf32> to vector<8x128xbf16>
    %4 = arith.extf %3 : vector<8x128xbf16> to vector<8x128xf32>
    %5 = arith.subf %2, %4 : vector<8x128xf32>
    %c0_3 = arith.constant 0 : index
    %c0_4 = arith.constant 0 : index
    %6 = vector.load %arg3[%c0_3, %c0_4] : memref<128x128xf32, #tpu.memory_space<vmem>>, vector<128x128xf32>
    %cst = arith.constant dense<0.000000e+00> : vector<8x128xf32>
    %7 = tpu.matmul %4, %6, %cst {dimension_numbers = #tpu.dot_dimension_numbers<[1], [0], [0], [1], [0, 0, 1, 1], [], []>} : vector<8x128xf32>, vector<128x128xf32>, vector<8x128xf32> -> vector<8x128xf32>
    %cst_5 = arith.constant dense<0.000000e+00> : vector<8x128xf32>
    %8 = tpu.matmul %5, %6, %cst_5 {dimension_numbers = #tpu.dot_dimension_numbers<[1], [0], [0], [1], [0, 0, 1, 1], [], []>} : vector<8x128xf32>, vector<128x128xf32>, vector<8x128xf32> -> vector<8x128xf32>
    %9 = arith.addf %7, %8 : vector<8x128xf32>
    %cst_6 = arith.constant 6.250000e-02 : f32
    %10 = vector.broadcast %cst_6 : f32 to vector<8x128xf32>
    %11 = arith.mulf %9, %10 : vector<8x128xf32>
    %12 = arith.subf %2, %11 : vector<8x128xf32>
    %13 = arith.mulf %12, %12 : vector<8x128xf32>
    %cst_7 = arith.constant dense<0.000000e+00> : vector<128xf32>
    %14 = vector.multi_reduction <add>, %13, %cst_7 [0] : vector<8x128xf32> to vector<128xf32>
    %15 = vector.shape_cast %14 : vector<128xf32> to vector<1x128xf32>
    %16 = vector.shape_cast %15 : vector<1x128xf32> to vector<1x1x128xf32>
    %c0_8 = arith.constant 0 : index
    %c0_9 = arith.constant 0 : index
    %c0_10 = arith.constant 0 : index
    %17 = vector.load %arg4[%c0_8, %c0_9, %c0_10] : memref<1x1x128xf32, #tpu.memory_space<vmem>>, vector<1x1x128xf32>
    tpu.vector_store %arg4[%c0_8, %c0_9, %c0_10], %16 {strides = array<i32>} : memref<1x1x128xf32, #tpu.memory_space<vmem>>, vector<1x1x128xf32>,
    return
  }
  func.func @transform_0(%arg0: i32) -> (i32, i32) {
    %c0_i32 = arith.constant 0 : i32
    %c0_i32_0 = arith.constant 0 : i32
    return %arg0, %c0_i32 : i32, i32
  }
  func.func @transform_1(%arg0: i32) -> (i32, i32) {
    %c0_i32 = arith.constant 0 : i32
    %c0_i32_0 = arith.constant 0 : i32
    return %arg0, %c0_i32 : i32, i32
  }
  func.func @transform_2(%arg0: i32) -> (i32, i32) {
    %c0_i32 = arith.constant 0 : i32
    %c0_i32_0 = arith.constant 0 : i32
    %c0_i32_1 = arith.constant 0 : i32
    return %c0_i32, %c0_i32_0 : i32, i32
  }
  func.func @transform_3(%arg0: i32) -> (i32, i32, i32) {
    %c0_i32 = arith.constant 0 : i32
    %c0_i32_0 = arith.constant 0 : i32
    %c0_i32_1 = arith.constant 0 : i32
    return %arg0, %c0_i32, %c0_i32_0 : i32, i32, i32
  }
}

</mosaic_0001>

<llo_original>
// kernel: tpu_custom_call.1
$region0: #{tpu_custom_call.1}
  #allocation0 [shape = 'u32[]', space=smem, size = 0x4, offset = 0x4, fixed_abs, tag = 'smem constant byte address 0x4 - core index']
  #allocation1 [shape = 'u32[72,128]{1,0:T(1,128)}', space=vmem, size = 0x9000, scoped, tag = 'internal scratch']
  %s0 = inlined_call_operand.hbm [shape: f32[8,128], index: 0, kind: input, shape index: {}]
  %s1 = inlined_call_operand.hbm [shape: f32[8,128], index: 1, kind: input, shape index: {}]
  %s2 = inlined_call_operand.hbm [shape: f32[128,128], index: 2, kind: input, shape index: {}]
  %s3 = inlined_call_operand.hbm [shape: f32[1,1,128], index: 3, kind: output, shape index: {}]
  %s4 = sld [smem:[#allocation0]]
  $region34: #{tpu_custom_call.1} parent=0
    _
  %s6 = ssub.s32 1, %s4
  %s7 = scalar_select 0, %s6, %s4
  $region1: #{tpu_custom_call.1} parent=0
    #allocation2 [shape = 'u8[4096]{0}', space=vmem, size = 0x1000, scoped, tag = 'input window, operand 0, single buffered']
    #allocation3 [shape = 's32[1]{0}', space=sflag, size = 0x4, scoped, tag = 'scoped memory for tpu_custom_call.1']
    #allocation4 [shape = 's32[1]{0}', space=sflag, size = 0x4, scoped, tag = 'scoped memory for tpu_custom_call.1']
    #allocation5 [shape = 'u8[4096]{0}', space=vmem, size = 0x1000, scoped, tag = 'input window, operand 1, single buffered']
    #allocation6 [shape = 's32[1]{0}', space=sflag, size = 0x4, scoped, tag = 'scoped memory for tpu_custom_call.1']
    #allocation7 [shape = 'u8[65536]{0}', space=vmem, size = 0x10000, scoped, tag = 'input window, operand 2, single buffered']
    #allocation8 [shape = 'u8[512]{0}', space=vmem, size = 0x400, scoped, tag = 'output window, operand 0, single buffered']
    %8 = vsyncpa [#allocation3], 0
    %9 = vsyncpa [#allocation6], 0
    %10 = vsyncpa [#allocation4], 0
    // Predicated region
    $region2: #{tpu_custom_call.1} parent=1 // pred_check
      _
    $region3: #{tpu_custom_call.1} parent=1 // pred_check_branch
      %12 = sbr.rel (0) target = $region5
    $region4: #{tpu_custom_call.1} parent=1 // pred_region
      %14 = vsyncadd [#allocation3], 0
      %s16 = sshll.u32 %s0, 4
      %s17 = int_to_ptr.hbm [resolvable:$true] %s16
      %s18 = sshll.u32 [#allocation2], 4
      %s19 = int_to_ptr.vmem [resolvable:$true] %s18
      %21 = dma.hbm_to_vmem [thread:$0]  %s17, 128, %s19, [#allocation3]
    $region5: #{tpu_custom_call.1} parent=1 // pred_fallthru
      _
    // Predicated region
    $region6: #{tpu_custom_call.1} parent=1 // pred_check
      _
    $region7: #{tpu_custom_call.1} parent=1 // pred_check_branch
      %23 = sbr.rel (0) target = $region9
    $region8: #{tpu_custom_call.1} parent=1 // pred_region
      %25 = vsyncadd [#allocation6], 0
      %s27 = sshll.u32 %s1, 4
      %s28 = int_to_ptr.hbm [resolvable:$true] %s27
      %s29 = sshll.u32 [#allocation5], 4
      %s30 = int_to_ptr.vmem [resolvable:$true] %s29
      %32 = dma.hbm_to_vmem [thread:$0]  %s28, 128, %s30, [#allocation6]
    $region9: #{tpu_custom_call.1} parent=1 // pred_fallthru
      _
    // Predicated region
    $region10: #{tpu_custom_call.1} parent=1 // pred_check
      _
    $region11: #{tpu_custom_call.1} parent=1 // pred_check_branch
      %34 = sbr.rel (0) target = $region13
    $region12: #{tpu_custom_call.1} parent=1 // pred_region
      %36 = vsyncadd [#allocation6], 0
      %s37 = sshll.u32 %s2, 4
      %s38 = int_to_ptr.hbm [resolvable:$true] %s37
      %s39 = sshll.u32 [#allocation7], 4
      %s40 = int_to_ptr.vmem [resolvable:$true] %s39
      %45 = dma.hbm_to_vmem [thread:$0]  %s38, 2048, %s40, [#allocation6], 128, 128, 8
    $region13: #{tpu_custom_call.1} parent=1 // pred_fallthru
      _
    // Predicated region
    $region14: #{tpu_custom_call.1} parent=1 // pred_check
      _
    $region15: #{tpu_custom_call.1} parent=1 // pred_check_branch
      %47 = sbr.rel (0) target = $region17
    $region16: #{tpu_custom_call.1} parent=1 // pred_region
      %49 = dma.done [#allocation3], 128
    $region17: #{tpu_custom_call.1} parent=1 // pred_fallthru
      _
    // Predicated region
    $region18: #{tpu_custom_call.1} parent=1 // pred_check
      _
    $region19: #{tpu_custom_call.1} parent=1 // pred_check_branch
      %51 = sbr.rel (0) target = $region21
    $region20: #{tpu_custom_call.1} parent=1 // pred_region
      %53 = dma.done [#allocation6], 128
    $region21: #{tpu_custom_call.1} parent=1 // pred_fallthru
      _
    // Predicated region
    $region22: #{tpu_custom_call.1} parent=1 // pred_check
      _
    $region23: #{tpu_custom_call.1} parent=1 // pred_check_branch
      %55 = sbr.rel (0) target = $region25
    $region24: #{tpu_custom_call.1} parent=1 // pred_region
      %57 = dma.done [#allocation6], 2048
    $region25: #{tpu_custom_call.1} parent=1 // pred_fallthru
      _
    %v58 = vld [vmem:[#allocation2] sm:$0xff]
    %v59 = vld [vmem:[#allocation5] sm:$0xff]
    %v60 = vsub.f32 %v58, %v59
    %v61 = vpack.c.bf16 %v60, %v60
    %v62 = vunpack.c.l.bf16 %v61
    %v63 = vsub.f32 %v60, %v62
    %v64 = vld [vmem:[#allocation7] sm:$0xff]
    %v65 = vld [vmem:[#allocation7 + $0x8] sm:$0xff]
    %v66 = vld [vmem:[#allocation7 + $0x10] sm:$0xff]
    %v67 = vld [vmem:[#allocation7 + $0x18] sm:$0xff]
    %v68 = vld [vmem:[#allocation7 + $0x20] sm:$0xff]
    %v69 = vld [vmem:[#allocation7 + $0x28] sm:$0xff]
    %v70 = vld [vmem:[#allocation7 + $0x30] sm:$0xff]
    %v71 = vld [vmem:[#allocation7 + $0x38] sm:$0xff]
    %v72 = vld [vmem:[#allocation7 + $0x40] sm:$0xff]
    %v73 = vld [vmem:[#allocation7 + $0x48] sm:$0xff]
    %v74 = vld [vmem:[#allocation7 + $0x50] sm:$0xff]
    %v75 = vld [vmem:[#allocation7 + $0x58] sm:$0xff]
    %v76 = vld [vmem:[#allocation7 + $0x60] sm:$0xff]
    %v77 = vld [vmem:[#allocation7 + $0x68] sm:$0xff]
    %v78 = vld [vmem:[#allocation7 + $0x70] sm:$0xff]
    %v79 = vld [vmem:[#allocation7 + $0x78] sm:$0xff]
    %80 = vmatpush.msra.mxu0 %v79
    %81 = vmatpush.msra.mxu0 %v78
    %82 = vmatpush.msra.mxu0 %v77
    %83 = vmatpush.msra.mxu0 %v76
    %84 = vmatpush.msra.mxu0 %v75
    %85 = vmatpush.msra.mxu0 %v74
    %86 = vmatpush.msra.mxu0 %v73
    %87 = vmatpush.msra.mxu0 %v72
    %88 = vmatpush.msra.mxu0 %v71
    %89 = vmatpush.msra.mxu0 %v70
    %90 = vmatpush.msra.mxu0 %v69
    %91 = vmatpush.msra.mxu0 %v68
    %92 = vmatpush.msra.mxu0 %v67
    %93 = vmatpush.msra.mxu0 %v66
    %94 = vmatpush.msra.mxu0 %v65
    %95 = vmatpush.msra.mxu0 %v64
    %96 = vmatmul.f32.gmra.mxu0 %v63
    %v97 = vpop.f32.mrf.mxu0
    %v98 = vadd.f32 0.0, %v97
    %99 = vdwg.mxu0
    %100 = vmatpush.msra.mxu0 %v79
    %101 = vmatpush.msra.mxu0 %v78
    %102 = vmatpush.msra.mxu0 %v77
    %103 = vmatpush.msra.mxu0 %v76
    %104 = vmatpush.msra.mxu0 %v75
    %105 = vmatpush.msra.mxu0 %v74
    %106 = vmatpush.msra.mxu0 %v73
    %107 = vmatpush.msra.mxu0 %v72
    %108 = vmatpush.msra.mxu0 %v71
    %109 = vmatpush.msra.mxu0 %v70
    %110 = vmatpush.msra.mxu0 %v69
    %111 = vmatpush.msra.mxu0 %v68
    %112 = vmatpush.msra.mxu0 %v67
    %113 = vmatpush.msra.mxu0 %v66
    %114 = vmatpush.msra.mxu0 %v65
    %115 = vmatpush.msra.mxu0 %v64
    %116 = vmatmul.f32.gmra.mxu0 %v62
    %v117 = vpop.f32.mrf.mxu0
    %v118 = vadd.f32 %v98, %v117
    %119 = vdwg.mxu0
    %v120 = vmul.f32 %v118, 0.0625
    %v121 = vsub.f32 %v60, %v120
    %v122 = vmul.f32 %v121, %v121
    %v123 = vrot.slane %v122, 4
    %v124 = vadd.f32 %v122, %v123
    %v125 = vrot.slane %v124, 2
    %v126 = vadd.f32 %v124, %v125
    %v127 = vrot.slane %v126, 1
    %v128 = vadd.f32 %v126, %v127
    %129 = vst [vmem:[#allocation8] sm:$0x1] %v128
    // Predicated region
    $region26: #{tpu_custom_call.1} parent=1 // pred_check
      _
    $region27: #{tpu_custom_call.1} parent=1 // pred_check_branch
      %131 = sbr.rel (0) target = $region29
    $region28: #{tpu_custom_call.1} parent=1 // pred_region
      %133 = vsyncadd [#allocation4], 0
      %s135 = sshll.u32 [#allocation8], 4
      %s136 = int_to_ptr.vmem [resolvable:$true] %s135
      %s137 = sshll.u32 %s3, 4
      %s138 = int_to_ptr.hbm [resolvable:$true] %s137
      %140 = dma.vmem_to_hbm [thread:$0]  %s136, 16, %s138, [#allocation4]
    $region29: #{tpu_custom_call.1} parent=1 // pred_fallthru
      _
    // Predicated region
    $region30: #{tpu_custom_call.1} parent=1 // pred_check
      _
    $region31: #{tpu_custom_call.1} parent=1 // pred_check_branch
      %142 = sbr.rel (0) target = $region33
    $region32: #{tpu_custom_call.1} parent=1 // pred_region
      %144 = dma.done [#allocation4], 16
    $region33: #{tpu_custom_call.1} parent=1 // pred_fallthru
      _
    %145 = vsyncpa [#allocation3], 1
    %146 = vsyncpa [#allocation6], 1
    %147 = vsyncpa [#allocation4], 1

</llo_original>
